<compile_context>
chip_gen: v7x
topology: tpu7x:2x2x1
jax: 0.10.0
libtpu: 0.0.40
codegen_flags: <defaults>
</compile_context>

<pallas_src>
import functools

import jax
import jax.numpy as jnp
from jax.experimental import pallas as pl
from jax.experimental.pallas import tpu as pltpu


def _pick_tile(n, cap, lane=False):
    """Largest divisor of n that is <= cap, preferring multiples of 128.

    lane=True  -> tile feeds a lane-facing (last) block dim: must be a multiple of
                  128 or the full extent (Mosaic BlockSpec constraint).
    lane=False -> sublane-facing: multiple of 8 (or the full extent) suffices.
    """
    req = 128 if lane else 8
    best = None
    for t in range(min(n, cap), 0, -1):
        if n % t:
            continue
        if t % 128 == 0:
            return t
        if best is None and t % req == 0:
            best = t
    return best if best is not None else n


def _kv_proj_kernel(x_ref, w_ref, kt_ref, v_ref, *, num_heads):
    # x_ref : (1, tm, C) bf16
    # w_ref : (C, 2C)    bf16   fused [Wk_eff | Wv_eff]
    # kt_ref: (1, H, d, tm) bf16  (K pre-transposed -> lane-dense stores, native QK^T RHS)
    # v_ref : (1, H, tm, d) bf16
    C = x_ref.shape[2]
    d = C // num_heads
    kv = jnp.dot(x_ref[0], w_ref[...], preferred_element_type=jnp.float32)  # (tm, 2C) f32
    for h in range(num_heads):
        # one transpose per (head, tile), amortized over every q-block of the flash pass
        kt_ref[0, h] = kv[:, h * d:(h + 1) * d].T.astype(kt_ref.dtype)       # (d, tm)
        v_ref[0, h] = kv[:, C + h * d:C + (h + 1) * d].astype(v_ref.dtype)   # (tm, d)


def _flash_attn_kernel(x_ref, wq_ref, kt_ref, v_ref, wout_ref, o_ref,
                       q_sc, m_sc, l_sc, acc_sc, ocat_sc, *, num_heads):
    # x_ref   : (1, tq, C) bf16        wq_ref  : (C, C) bf16 (scale folded in)
    # kt_ref  : (1, H, d, tk) bf16     v_ref   : (1, H, tk, d) bf16
    # wout_ref: (C, C) bf16            o_ref   : (1, tq, C)
    # scratch : q (H,tq,d) bf16, m/l (H,tq,1) f32, acc (H,tq,d) f32, ocat (tq,C) bf16
    ki = pl.program_id(2)
    C = x_ref.shape[2]
    d = C // num_heads

    @pl.when(ki == 0)
    def _():
        # Fused Q projection: one full K=C MXU matmul per (b, q-block), head split once.
        q = jnp.dot(x_ref[0], wq_ref[...],
                    preferred_element_type=jnp.float32).astype(q_sc.dtype)   # (tq, C)
        for h in range(num_heads):
            q_sc[h] = q[:, h * d:(h + 1) * d]
        m_sc[...] = jnp.full_like(m_sc, -jnp.inf)
        l_sc[...] = jnp.zeros_like(l_sc)
        acc_sc[...] = jnp.zeros_like(acc_sc)

    q = q_sc[...]        # (H, tq, d) bf16
    kt = kt_ref[0]       # (H, d, tk) bf16  -- already transposed, native MXU RHS
    v = v_ref[0]         # (H, tk, d) bf16

    s = jnp.einsum("hqd,hdk->hqk", q, kt,
                   preferred_element_type=jnp.float32)                       # (H, tq, tk)

    m_new = jnp.maximum(m_sc[...], s.max(axis=-1, keepdims=True))
    alpha = jnp.exp(m_sc[...] - m_new)
    p = jnp.exp(s - m_new)                                                   # f32 softmax math
    l_sc[...] = alpha * l_sc[...] + p.sum(axis=-1, keepdims=True)
    acc_sc[...] = alpha * acc_sc[...] + jnp.einsum(
        "hqk,hkd->hqd", p.astype(v.dtype), v, preferred_element_type=jnp.float32)
    m_sc[...] = m_new

    @pl.when(ki == pl.num_programs(2) - 1)
    def _():
        # Normalize (EUP approx reciprocal), concatenate heads into a lane-dense (tq, C)
        # scratch, then ONE K=C out-projection matmul (full MXU contraction depth).
        o_heads = (acc_sc[...] * pl.reciprocal(l_sc[...], approx=True)
                   ).astype(ocat_sc.dtype)                                   # (H, tq, d)
        for h in range(num_heads):
            ocat_sc[:, h * d:(h + 1) * d] = o_heads[h]
        o_ref[0] = jnp.dot(ocat_sc[...], wout_ref[...],
                           preferred_element_type=jnp.float32).astype(o_ref.dtype)


def attention_forward(x, w_qkv, w_in, w_out, num_heads):
    B, N, C = x.shape
    assert C % num_heads == 0, "dim must be divisible by num_heads"
    d = C // num_heads
    scale = d ** -0.5  # MultiheadAttention's internal scaling

    # --- wrapper-side weight fusion (tiny (C,*) work, runs once in XLA) ---
    w_q_eff = ((w_qkv[:, 0 * C:1 * C] @ w_in[:, 0 * C:1 * C]) * scale).astype(jnp.bfloat16)
    w_k_eff = w_qkv[:, 1 * C:2 * C] @ w_in[:, 1 * C:2 * C]
    w_v_eff = w_qkv[:, 2 * C:3 * C] @ w_in[:, 2 * C:3 * C]
    w_kv = jnp.concatenate([w_k_eff, w_v_eff], axis=-1).astype(jnp.bfloat16)   # (C, 2C)
    w_out_b = w_out.astype(jnp.bfloat16)
    xb = x.astype(jnp.bfloat16)

    # Tile selection: lane-facing tiles (tm feeds K^T's last dim, tk feeds scores/K^T)
    # must be multiples of 128 (or full N); tq only needs sublane alignment.
    tm = _pick_tile(N, 512, lane=True)
    tq = _pick_tile(N, 512, lane=False)
    tk = _pick_tile(N, 256, lane=True)
    vmem_limit = 64 * 1024 * 1024

    # --- kernel 1: fused K/V projection, K written pre-transposed (B, H, d, N) ---
    kv_kernel = functools.partial(_kv_proj_kernel, num_heads=num_heads)
    k_t, v_h = pl.pallas_call(
        kv_kernel,
        out_shape=(
            jax.ShapeDtypeStruct((B, num_heads, d, N), jnp.bfloat16),
            jax.ShapeDtypeStruct((B, num_heads, N, d), jnp.bfloat16),
        ),
        grid_spec=pltpu.PrefetchScalarGridSpec(
            num_scalar_prefetch=0,
            grid=(B, N // tm),
            in_specs=[
                pl.BlockSpec((1, tm, C), lambda b, i: (b, i, 0)),
                pl.BlockSpec((C, 2 * C), lambda b, i: (0, 0)),
            ],
            out_specs=[
                pl.BlockSpec((1, num_heads, d, tm), lambda b, i: (b, 0, 0, i)),
                pl.BlockSpec((1, num_heads, tm, d), lambda b, i: (b, 0, i, 0)),
            ],
        ),
        compiler_params=pltpu.CompilerParams(
            dimension_semantics=("parallel", "parallel"),
            vmem_limit_bytes=vmem_limit),
    )(xb, w_kv)

    # --- kernel 2: flash attention + fused Q projection (prologue) + out-proj (epilogue)
    flash_kernel = functools.partial(_flash_attn_kernel, num_heads=num_heads)
    out = pl.pallas_call(
        flash_kernel,
        out_shape=jax.ShapeDtypeStruct((B, N, C), x.dtype),
        grid_spec=pltpu.PrefetchScalarGridSpec(
            num_scalar_prefetch=0,
            grid=(B, N // tq, N // tk),
            in_specs=[
                pl.BlockSpec((1, tq, C), lambda b, qi, ki: (b, qi, 0)),               # x
                pl.BlockSpec((C, C), lambda b, qi, ki: (0, 0)),                        # Wq_eff
                pl.BlockSpec((1, num_heads, d, tk), lambda b, qi, ki: (b, 0, 0, ki)),  # K^T
                pl.BlockSpec((1, num_heads, tk, d), lambda b, qi, ki: (b, 0, ki, 0)),  # V
                pl.BlockSpec((C, C), lambda b, qi, ki: (0, 0)),                        # Wout
            ],
            out_specs=pl.BlockSpec((1, tq, C), lambda b, qi, ki: (b, qi, 0)),
            scratch_shapes=[
                pltpu.VMEM((num_heads, tq, d), jnp.bfloat16),   # Q (head-split, persists over ki)
                pltpu.VMEM((num_heads, tq, 1), jnp.float32),    # running max
                pltpu.VMEM((num_heads, tq, 1), jnp.float32),    # running sum
                pltpu.VMEM((num_heads, tq, d), jnp.float32),    # output accumulator
                pltpu.VMEM((tq, C), jnp.bfloat16),              # concatenated heads (lane-dense)
            ],
        ),
        compiler_params=pltpu.CompilerParams(
            dimension_semantics=("parallel", "parallel", "arbitrary"),
            vmem_limit_bytes=vmem_limit),
    )(xb, w_q_eff, k_t, v_h, w_out_b)

    return out


def attention_reference(x, w_qkv, w_in, w_out, num_heads):
    """Pure-JAX f32 reference of the same forward pass (for correctness check)."""
    B, N, C = x.shape
    d = C // num_heads
    scale = d ** -0.5
    qkv0 = x @ w_qkv
    q0, k0, v0 = jnp.split(qkv0, 3, axis=-1)
    q = q0 @ w_in[:, :C]
    k = k0 @ w_in[:, C:2 * C]
    v = v0 @ w_in[:, 2 * C:]
    qh = q.reshape(B, N, num_heads, d).transpose(0, 2, 1, 3) * scale
    kh = k.reshape(B, N, num_heads, d).transpose(0, 2, 1, 3)
    vh = v.reshape(B, N, num_heads, d).transpose(0, 2, 1, 3)
    s = jnp.einsum("bhnd,bhmd->bhnm", qh, kh)
    p = jax.nn.softmax(s, axis=-1)
    o = jnp.einsum("bhnm,bhmd->bhnd", p, vh)
    o = o.transpose(0, 2, 1, 3).reshape(B, N, C)
    return o @ w_out


if __name__ == "__main__":
    # small shapes consistent with the module: dim=C must be divisible by num_heads
    B, N, C, H = 2, 8, 32, 8

    key = jax.random.PRNGKey(0)
    kx, k1, k2, k3 = jax.random.split(key, 4)
    x = jax.random.normal(kx, (B, N, C), jnp.float32)
    # deterministic synthetic parameters (shapes match the torch module, transposed)
    w_qkv = jax.random.normal(k1, (C, 3 * C), jnp.float32) * (C ** -0.5)  # qkv.weight.T
    w_in = jax.random.normal(k2, (C, 3 * C), jnp.float32) * (C ** -0.5)   # in_proj_weight.T
    w_out = jax.random.normal(k3, (C, C), jnp.float32) * (C ** -0.5)      # out_proj.weight.T

    out = attention_forward(x, w_qkv, w_in, w_out, H)
    out = jax.block_until_ready(out)

    ref = attention_reference(x, w_qkv, w_in, w_out, H)
    assert out.shape == (B, N, C)
    # bf16 MXU operands + approx reciprocal -> looser tolerance than pure f32
    assert jnp.allclose(out, ref, atol=5e-2, rtol=5e-2), "Pallas output mismatch vs reference"
    print("KERNEL_OK")
</pallas_src>

<mosaic_0001>
module attributes {stable_mosaic.version = 11 : i64} {
  func.func @_kv_proj_kernel(%arg0: i32, %arg1: i32, %arg2: memref<1x8x32xbf16, #tpu.memory_space<vmem>>, %arg3: memref<32x64xbf16, #tpu.memory_space<vmem>>, %arg4: memref<1x8x4x8xbf16, #tpu.memory_space<vmem>>, %arg5: memref<1x8x8x4xbf16, #tpu.memory_space<vmem>>) attributes {dimension_semantics = [#tpu.dimension_semantics<parallel>, #tpu.dimension_semantics<parallel>], iteration_bounds = array<i64: 2, 1>, scalar_prefetch = 0 : i64, scratch_operands = 0 : i64, tpu.core_type = #tpu.core_type<tc>, window_params = [{transform_indices = @transform_0, window_bounds = array<i64: 1, 8, 32>}, {pipeline_mode = #tpu.pipeline_mode<synchronous>, transform_indices = @transform_1, window_bounds = array<i64: 32, 64>}, {transform_indices = @transform_2, window_bounds = array<i64: 1, 8, 4, 8>}, {transform_indices = @transform_3, window_bounds = array<i64: 1, 8, 8, 4>}]} {
    %c0 = arith.constant 0 : index
    %c0_0 = arith.constant 0 : index
    %c0_1 = arith.constant 0 : index
    %0 = vector.load %arg2[%c0, %c0_0, %c0_1] : memref<1x8x32xbf16, #tpu.memory_space<vmem>>, vector<1x8x32xbf16>
    %1 = vector.shape_cast %0 : vector<1x8x32xbf16> to vector<8x32xbf16>
    %c0_2 = arith.constant 0 : index
    %c0_3 = arith.constant 0 : index
    %2 = vector.load %arg3[%c0_2, %c0_3] : memref<32x64xbf16, #tpu.memory_space<vmem>>, vector<32x64xbf16>
    %cst = arith.constant dense<0.000000e+00> : vector<8x64xf32>
    %3 = tpu.matmul %1, %2, %cst {dimension_numbers = #tpu.dot_dimension_numbers<[1], [0], [0], [1], [0, 0, 1, 1], [], []>} : vector<8x32xbf16>, vector<32x64xbf16>, vector<8x64xf32> -> vector<8x64xf32>
    %4 = vector.extract_strided_slice %3 {offsets = [0, 0], sizes = [8, 4], strides = [1, 1]} : vector<8x64xf32> to vector<8x4xf32>
    %5 = tpu.transpose %4, [1, 0] : vector<8x4xf32> -> vector<4x8xf32>
    %6 = arith.truncf %5 : vector<4x8xf32> to vector<4x8xbf16>
    %c0_4 = arith.constant 0 : index
    %c0_5 = arith.constant 0 : index
    %c0_6 = arith.constant 0 : index
    %c0_7 = arith.constant 0 : index
    %7 = vector.load %arg4[%c0_4, %c0_5, %c0_6, %c0_7] : memref<1x8x4x8xbf16, #tpu.memory_space<vmem>>, vector<1x1x4x8xbf16>
    %8 = vector.shape_cast %7 : vector<1x1x4x8xbf16> to vector<4x8xbf16>
    %9 = vector.shape_cast %6 : vector<4x8xbf16> to vector<1x1x4x8xbf16>
    tpu.vector_store %arg4[%c0_4, %c0_5, %c0_6, %c0_7], %9 {strides = array<i32>} : memref<1x8x4x8xbf16, #tpu.memory_space<vmem>>, vector<1x1x4x8xbf16>,
    %10 = vector.extract_strided_slice %3 {offsets = [0, 32], sizes = [8, 4], strides = [1, 1]} : vector<8x64xf32> to vector<8x4xf32>
    %11 = arith.truncf %10 : vector<8x4xf32> to vector<8x4xbf16>
    %c0_8 = arith.constant 0 : index
    %c0_9 = arith.constant 0 : index
    %c0_10 = arith.constant 0 : index
    %c0_11 = arith.constant 0 : index
    %12 = vector.load %arg5[%c0_8, %c0_9, %c0_10, %c0_11] : memref<1x8x8x4xbf16, #tpu.memory_space<vmem>>, vector<1x1x8x4xbf16>
    %13 = vector.shape_cast %12 : vector<1x1x8x4xbf16> to vector<8x4xbf16>
    %14 = vector.shape_cast %11 : vector<8x4xbf16> to vector<1x1x8x4xbf16>
    tpu.vector_store %arg5[%c0_8, %c0_9, %c0_10, %c0_11], %14 {strides = array<i32>} : memref<1x8x8x4xbf16, #tpu.memory_space<vmem>>, vector<1x1x8x4xbf16>,
    %15 = vector.extract_strided_slice %3 {offsets = [0, 4], sizes = [8, 4], strides = [1, 1]} : vector<8x64xf32> to vector<8x4xf32>
    %16 = tpu.transpose %15, [1, 0] : vector<8x4xf32> -> vector<4x8xf32>
    %17 = arith.truncf %16 : vector<4x8xf32> to vector<4x8xbf16>
    %c0_12 = arith.constant 0 : index
    %c1 = arith.constant 1 : index
    %c0_13 = arith.constant 0 : index
    %c0_14 = arith.constant 0 : index
    %18 = vector.load %arg4[%c0_12, %c1, %c0_13, %c0_14] : memref<1x8x4x8xbf16, #tpu.memory_space<vmem>>, vector<1x1x4x8xbf16>
    %19 = vector.shape_cast %18 : vector<1x1x4x8xbf16> to vector<4x8xbf16>
    %20 = vector.shape_cast %17 : vector<4x8xbf16> to vector<1x1x4x8xbf16>
    tpu.vector_store %arg4[%c0_12, %c1, %c0_13, %c0_14], %20 {strides = array<i32>} : memref<1x8x4x8xbf16, #tpu.memory_space<vmem>>, vector<1x1x4x8xbf16>,
    %21 = vector.extract_strided_slice %3 {offsets = [0, 36], sizes = [8, 4], strides = [1, 1]} : vector<8x64xf32> to vector<8x4xf32>
    %22 = arith.truncf %21 : vector<8x4xf32> to vector<8x4xbf16>
    %c0_15 = arith.constant 0 : index
    %c1_16 = arith.constant 1 : index
    %c0_17 = arith.constant 0 : index
    %c0_18 = arith.constant 0 : index
    %23 = vector.load %arg5[%c0_15, %c1_16, %c0_17, %c0_18] : memref<1x8x8x4xbf16, #tpu.memory_space<vmem>>, vector<1x1x8x4xbf16>
    %24 = vector.shape_cast %23 : vector<1x1x8x4xbf16> to vector<8x4xbf16>
    %25 = vector.shape_cast %22 : vector<8x4xbf16> to vector<1x1x8x4xbf16>
    tpu.vector_store %arg5[%c0_15, %c1_16, %c0_17, %c0_18], %25 {strides = array<i32>} : memref<1x8x8x4xbf16, #tpu.memory_space<vmem>>, vector<1x1x8x4xbf16>,
    %26 = vector.extract_strided_slice %3 {offsets = [0, 8], sizes = [8, 4], strides = [1, 1]} : vector<8x64xf32> to vector<8x4xf32>
    %27 = tpu.transpose %26, [1, 0] : vector<8x4xf32> -> vector<4x8xf32>
    %28 = arith.truncf %27 : vector<4x8xf32> to vector<4x8xbf16>
    %c0_19 = arith.constant 0 : index
    %c2 = arith.constant 2 : index
    %c0_20 = arith.constant 0 : index
    %c0_21 = arith.constant 0 : index
    %29 = vector.load %arg4[%c0_19, %c2, %c0_20, %c0_21] : memref<1x8x4x8xbf16, #tpu.memory_space<vmem>>, vector<1x1x4x8xbf16>
    %30 = vector.shape_cast %29 : vector<1x1x4x8xbf16> to vector<4x8xbf16>
    %31 = vector.shape_cast %28 : vector<4x8xbf16> to vector<1x1x4x8xbf16>
    tpu.vector_store %arg4[%c0_19, %c2, %c0_20, %c0_21], %31 {strides = array<i32>} : memref<1x8x4x8xbf16, #tpu.memory_space<vmem>>, vector<1x1x4x8xbf16>,
    %32 = vector.extract_strided_slice %3 {offsets = [0, 40], sizes = [8, 4], strides = [1, 1]} : vector<8x64xf32> to vector<8x4xf32>
    %33 = arith.truncf %32 : vector<8x4xf32> to vector<8x4xbf16>
    %c0_22 = arith.constant 0 : index
    %c2_23 = arith.constant 2 : index
    %c0_24 = arith.constant 0 : index
    %c0_25 = arith.constant 0 : index
    %34 = vector.load %arg5[%c0_22, %c2_23, %c0_24, %c0_25] : memref<1x8x8x4xbf16, #tpu.memory_space<vmem>>, vector<1x1x8x4xbf16>
    %35 = vector.shape_cast %34 : vector<1x1x8x4xbf16> to vector<8x4xbf16>
    %36 = vector.shape_cast %33 : vector<8x4xbf16> to vector<1x1x8x4xbf16>
    tpu.vector_store %arg5[%c0_22, %c2_23, %c0_24, %c0_25], %36 {strides = array<i32>} : memref<1x8x8x4xbf16, #tpu.memory_space<vmem>>, vector<1x1x8x4xbf16>,
    %37 = vector.extract_strided_slice %3 {offsets = [0, 12], sizes = [8, 4], strides = [1, 1]} : vector<8x64xf32> to vector<8x4xf32>
    %38 = tpu.transpose %37, [1, 0] : vector<8x4xf32> -> vector<4x8xf32>
    %39 = arith.truncf %38 : vector<4x8xf32> to vector<4x8xbf16>
    %c0_26 = arith.constant 0 : index
    %c3 = arith.constant 3 : index
    %c0_27 = arith.constant 0 : index
    %c0_28 = arith.constant 0 : index
    %40 = vector.load %arg4[%c0_26, %c3, %c0_27, %c0_28] : memref<1x8x4x8xbf16, #tpu.memory_space<vmem>>, vector<1x1x4x8xbf16>
    %41 = vector.shape_cast %40 : vector<1x1x4x8xbf16> to vector<4x8xbf16>
    %42 = vector.shape_cast %39 : vector<4x8xbf16> to vector<1x1x4x8xbf16>
    tpu.vector_store %arg4[%c0_26, %c3, %c0_27, %c0_28], %42 {strides = array<i32>} : memref<1x8x4x8xbf16, #tpu.memory_space<vmem>>, vector<1x1x4x8xbf16>,
    %43 = vector.extract_strided_slice %3 {offsets = [0, 44], sizes = [8, 4], strides = [1, 1]} : vector<8x64xf32> to vector<8x4xf32>
    %44 = arith.truncf %43 : vector<8x4xf32> to vector<8x4xbf16>
    %c0_29 = arith.constant 0 : index
    %c3_30 = arith.constant 3 : index
    %c0_31 = arith.constant 0 : index
    %c0_32 = arith.constant 0 : index
    %45 = vector.load %arg5[%c0_29, %c3_30, %c0_31, %c0_32] : memref<1x8x8x4xbf16, #tpu.memory_space<vmem>>, vector<1x1x8x4xbf16>
    %46 = vector.shape_cast %45 : vector<1x1x8x4xbf16> to vector<8x4xbf16>
    %47 = vector.shape_cast %44 : vector<8x4xbf16> to vector<1x1x8x4xbf16>
    tpu.vector_store %arg5[%c0_29, %c3_30, %c0_31, %c0_32], %47 {strides = array<i32>} : memref<1x8x8x4xbf16, #tpu.memory_space<vmem>>, vector<1x1x8x4xbf16>,
    %48 = vector.extract_strided_slice %3 {offsets = [0, 16], sizes = [8, 4], strides = [1, 1]} : vector<8x64xf32> to vector<8x4xf32>
    %49 = tpu.transpose %48, [1, 0] : vector<8x4xf32> -> vector<4x8xf32>
    %50 = arith.truncf %49 : vector<4x8xf32> to vector<4x8xbf16>
    %c0_33 = arith.constant 0 : index
    %c4 = arith.constant 4 : index
    %c0_34 = arith.constant 0 : index
    %c0_35 = arith.constant 0 : index
    %51 = vector.load %arg4[%c0_33, %c4, %c0_34, %c0_35] : memref<1x8x4x8xbf16, #tpu.memory_space<vmem>>, vector<1x1x4x8xbf16>
    %52 = vector.shape_cast %51 : vector<1x1x4x8xbf16> to vector<4x8xbf16>
    %53 = vector.shape_cast %50 : vector<4x8xbf16> to vector<1x1x4x8xbf16>
    tpu.vector_store %arg4[%c0_33, %c4, %c0_34, %c0_35], %53 {strides = array<i32>} : memref<1x8x4x8xbf16, #tpu.memory_space<vmem>>, vector<1x1x4x8xbf16>,
    %54 = vector.extract_strided_slice %3 {offsets = [0, 48], sizes = [8, 4], strides = [1, 1]} : vector<8x64xf32> to vector<8x4xf32>
    %55 = arith.truncf %54 : vector<8x4xf32> to vector<8x4xbf16>
    %c0_36 = arith.constant 0 : index
    %c4_37 = arith.constant 4 : index
    %c0_38 = arith.constant 0 : index
    %c0_39 = arith.constant 0 : index
    %56 = vector.load %arg5[%c0_36, %c4_37, %c0_38, %c0_39] : memref<1x8x8x4xbf16, #tpu.memory_space<vmem>>, vector<1x1x8x4xbf16>
    %57 = vector.shape_cast %56 : vector<1x1x8x4xbf16> to vector<8x4xbf16>
    %58 = vector.shape_cast %55 : vector<8x4xbf16> to vector<1x1x8x4xbf16>
    tpu.vector_store %arg5[%c0_36, %c4_37, %c0_38, %c0_39], %58 {strides = array<i32>} : memref<1x8x8x4xbf16, #tpu.memory_space<vmem>>, vector<1x1x8x4xbf16>,
    %59 = vector.extract_strided_slice %3 {offsets = [0, 20], sizes = [8, 4], strides = [1, 1]} : vector<8x64xf32> to vector<8x4xf32>
    %60 = tpu.transpose %59, [1, 0] : vector<8x4xf32> -> vector<4x8xf32>
    %61 = arith.truncf %60 : vector<4x8xf32> to vector<4x8xbf16>
    %c0_40 = arith.constant 0 : index
    %c5 = arith.constant 5 : index
    %c0_41 = arith.constant 0 : index
    %c0_42 = arith.constant 0 : index
    %62 = vector.load %arg4[%c0_40, %c5, %c0_41, %c0_42] : memref<1x8x4x8xbf16, #tpu.memory_space<vmem>>, vector<1x1x4x8xbf16>
    %63 = vector.shape_cast %62 : vector<1x1x4x8xbf16> to vector<4x8xbf16>
    %64 = vector.shape_cast %61 : vector<4x8xbf16> to vector<1x1x4x8xbf16>
    tpu.vector_store %arg4[%c0_40, %c5, %c0_41, %c0_42], %64 {strides = array<i32>} : memref<1x8x4x8xbf16, #tpu.memory_space<vmem>>, vector<1x1x4x8xbf16>,
    %65 = vector.extract_strided_slice %3 {offsets = [0, 52], sizes = [8, 4], strides = [1, 1]} : vector<8x64xf32> to vector<8x4xf32>
    %66 = arith.truncf %65 : vector<8x4xf32> to vector<8x4xbf16>
    %c0_43 = arith.constant 0 : index
    %c5_44 = arith.constant 5 : index
    %c0_45 = arith.constant 0 : index
    %c0_46 = arith.constant 0 : index
    %67 = vector.load %arg5[%c0_43, %c5_44, %c0_45, %c0_46] : memref<1x8x8x4xbf16, #tpu.memory_space<vmem>>, vector<1x1x8x4xbf16>
    %68 = vector.shape_cast %67 : vector<1x1x8x4xbf16> to vector<8x4xbf16>
    %69 = vector.shape_cast %66 : vector<8x4xbf16> to vector<1x1x8x4xbf16>
    tpu.vector_store %arg5[%c0_43, %c5_44, %c0_45, %c0_46], %69 {strides = array<i32>} : memref<1x8x8x4xbf16, #tpu.memory_space<vmem>>, vector<1x1x8x4xbf16>,
    %70 = vector.extract_strided_slice %3 {offsets = [0, 24], sizes = [8, 4], strides = [1, 1]} : vector<8x64xf32> to vector<8x4xf32>
    %71 = tpu.transpose %70, [1, 0] : vector<8x4xf32> -> vector<4x8xf32>
    %72 = arith.truncf %71 : vector<4x8xf32> to vector<4x8xbf16>
    %c0_47 = arith.constant 0 : index
    %c6 = arith.constant 6 : index
    %c0_48 = arith.constant 0 : index
    %c0_49 = arith.constant 0 : index
    %73 = vector.load %arg4[%c0_47, %c6, %c0_48, %c0_49] : memref<1x8x4x8xbf16, #tpu.memory_space<vmem>>, vector<1x1x4x8xbf16>
    %74 = vector.shape_cast %73 : vector<1x1x4x8xbf16> to vector<4x8xbf16>
    %75 = vector.shape_cast %72 : vector<4x8xbf16> to vector<1x1x4x8xbf16>
    tpu.vector_store %arg4[%c0_47, %c6, %c0_48, %c0_49], %75 {strides = array<i32>} : memref<1x8x4x8xbf16, #tpu.memory_space<vmem>>, vector<1x1x4x8xbf16>,
    %76 = vector.extract_strided_slice %3 {offsets = [0, 56], sizes = [8, 4], strides = [1, 1]} : vector<8x64xf32> to vector<8x4xf32>
    %77 = arith.truncf %76 : vector<8x4xf32> to vector<8x4xbf16>
    %c0_50 = arith.constant 0 : index
    %c6_51 = arith.constant 6 : index
    %c0_52 = arith.constant 0 : index
    %c0_53 = arith.constant 0 : index
    %78 = vector.load %arg5[%c0_50, %c6_51, %c0_52, %c0_53] : memref<1x8x8x4xbf16, #tpu.memory_space<vmem>>, vector<1x1x8x4xbf16>
    %79 = vector.shape_cast %78 : vector<1x1x8x4xbf16> to vector<8x4xbf16>
    %80 = vector.shape_cast %77 : vector<8x4xbf16> to vector<1x1x8x4xbf16>
    tpu.vector_store %arg5[%c0_50, %c6_51, %c0_52, %c0_53], %80 {strides = array<i32>} : memref<1x8x8x4xbf16, #tpu.memory_space<vmem>>, vector<1x1x8x4xbf16>,
    %81 = vector.extract_strided_slice %3 {offsets = [0, 28], sizes = [8, 4], strides = [1, 1]} : vector<8x64xf32> to vector<8x4xf32>
    %82 = tpu.transpose %81, [1, 0] : vector<8x4xf32> -> vector<4x8xf32>
    %83 = arith.truncf %82 : vector<4x8xf32> to vector<4x8xbf16>
    %c0_54 = arith.constant 0 : index
    %c7 = arith.constant 7 : index
    %c0_55 = arith.constant 0 : index
    %c0_56 = arith.constant 0 : index
    %84 = vector.load %arg4[%c0_54, %c7, %c0_55, %c0_56] : memref<1x8x4x8xbf16, #tpu.memory_space<vmem>>, vector<1x1x4x8xbf16>
    %85 = vector.shape_cast %84 : vector<1x1x4x8xbf16> to vector<4x8xbf16>
    %86 = vector.shape_cast %83 : vector<4x8xbf16> to vector<1x1x4x8xbf16>
    tpu.vector_store %arg4[%c0_54, %c7, %c0_55, %c0_56], %86 {strides = array<i32>} : memref<1x8x4x8xbf16, #tpu.memory_space<vmem>>, vector<1x1x4x8xbf16>,
    %87 = vector.extract_strided_slice %3 {offsets = [0, 60], sizes = [8, 4], strides = [1, 1]} : vector<8x64xf32> to vector<8x4xf32>
    %88 = arith.truncf %87 : vector<8x4xf32> to vector<8x4xbf16>
    %c0_57 = arith.constant 0 : index
    %c7_58 = arith.constant 7 : index
    %c0_59 = arith.constant 0 : index
    %c0_60 = arith.constant 0 : index
    %89 = vector.load %arg5[%c0_57, %c7_58, %c0_59, %c0_60] : memref<1x8x8x4xbf16, #tpu.memory_space<vmem>>, vector<1x1x8x4xbf16>
    %90 = vector.shape_cast %89 : vector<1x1x8x4xbf16> to vector<8x4xbf16>
    %91 = vector.shape_cast %88 : vector<8x4xbf16> to vector<1x1x8x4xbf16>
    tpu.vector_store %arg5[%c0_57, %c7_58, %c0_59, %c0_60], %91 {strides = array<i32>} : memref<1x8x8x4xbf16, #tpu.memory_space<vmem>>, vector<1x1x8x4xbf16>,
    return
  }
  func.func @transform_0(%arg0: i32, %arg1: i32) -> (i32, i32, i32) {
    %c0_i32 = arith.constant 0 : i32
    %c0_i32_0 = arith.constant 0 : i32
    return %arg0, %arg1, %c0_i32 : i32, i32, i32
  }
  func.func @transform_1(%arg0: i32, %arg1: i32) -> (i32, i32) {
    %c0_i32 = arith.constant 0 : i32
    %c0_i32_0 = arith.constant 0 : i32
    %c0_i32_1 = arith.constant 0 : i32
    return %c0_i32, %c0_i32_0 : i32, i32
  }
  func.func @transform_2(%arg0: i32, %arg1: i32) -> (i32, i32, i32, i32) {
    %c0_i32 = arith.constant 0 : i32
    %c0_i32_0 = arith.constant 0 : i32
    %c0_i32_1 = arith.constant 0 : i32
    return %arg0, %c0_i32, %c0_i32_0, %arg1 : i32, i32, i32, i32
  }
  func.func @transform_3(%arg0: i32, %arg1: i32) -> (i32, i32, i32, i32) {
    %c0_i32 = arith.constant 0 : i32
    %c0_i32_0 = arith.constant 0 : i32
    %c0_i32_1 = arith.constant 0 : i32
    return %arg0, %c0_i32, %arg1, %c0_i32_0 : i32, i32, i32, i32
  }
}

</mosaic_0001>

<llo_original>
// kernel: tpu_custom_call.1
$region0: #{tpu_custom_call.1}
  #allocation0 [shape = 'u32[]', space=smem, size = 0x4, offset = 0x4, fixed_abs, tag = 'smem constant byte address 0x4 - core index']
  #allocation1 [shape = 'u32[144,128]{1,0:T(1,128)}', space=vmem, size = 0x12000, scoped, tag = 'internal scratch']
  %s0 = inlined_call_operand.hbm [shape: bf16[2,8,32], index: 0, kind: input, shape index: {}]
  %s1 = inlined_call_operand.hbm [shape: bf16[32,64], index: 1, kind: input, shape index: {}]
  %s2 = inlined_call_operand.hbm [shape: bf16[2,8,4,8], index: 2, kind: output, shape index: {0}]
  %s3 = inlined_call_operand.hbm [shape: bf16[2,8,8,4], index: 3, kind: output, shape index: {1}]
  %4 = xla_tuple %s2, %s3
  %s5 = sld [smem:[#allocation0]]
  $region57: #{tpu_custom_call.1} parent=0
    _
  %s7 = ssub.s32 1, %s5
  %s8 = scalar_select 0, %s7, %s5
  $region1: #{tpu_custom_call.1} parent=0
    #allocation2 [shape = 'u8[4096]{0}', space=vmem, size = 0x1000, scoped, tag = 'input window, operand 0']
    #allocation3 [shape = 's32[2]{0}', space=sflag, size = 0x8, scoped, tag = 'scoped memory for tpu_custom_call.1']
    #allocation4 [shape = 's32[2]{0}', space=sflag, size = 0x8, scoped, tag = 'scoped memory for tpu_custom_call.1']
    #allocation5 [shape = 'u8[8192]{0}', space=vmem, size = 0x2000, scoped, tag = 'input window, operand 1, single buffered']
    #allocation6 [shape = 's32[1]{0}', space=sflag, size = 0x4, scoped, tag = 'scoped memory for tpu_custom_call.1']
    #allocation7 [shape = 'u8[16384]{0}', space=vmem, size = 0x4000, scoped, tag = 'output window, operand 0']
    #allocation8 [shape = 'u8[32768]{0}', space=vmem, size = 0x8000, scoped, tag = 'output window, operand 1']
    #allocation9 [shape = 's32[2]{0}', space=sflag, size = 0x8, scoped, tag = 'scoped memory for tpu_custom_call.1']
    %9 = vsyncpa [#allocation3], 0
    %s10 = scalar_lea.sflag [#allocation3], 1
    %11 = vsyncpa %s10, 0
    %12 = vsyncpa [#allocation6], 0
    %13 = vsyncpa [#allocation4], 0
    %s14 = scalar_lea.sflag [#allocation4], 1
    %15 = vsyncpa %s14, 0
    %16 = vsyncpa [#allocation9], 0
    %s17 = scalar_lea.sflag [#allocation9], 1
    %18 = vsyncpa %s17, 0
    loop: start=0, step=1, limit=4
    $region2: #{tpu_custom_call.1} parent=1 // loop_pre_header
      _
    $region3: #{tpu_custom_call.1} parent=1 // loop_header
      %s20 = sphi 0, %s24
      %p21 = scmp.ge.s32.totalorder %s20, 4
      %s27 = sphi 0, %s39
      %s28 = sphi 0, %s35
      %s29 = sphi 0, %s27
      %s30 = sphi 0, %s28
      %s31 = sphi 0, %s29
      %s32 = sphi 0, %s30
      %s44 = sphi 0, %s46
      %s47 = sphi 0, %s44
      %s48 = sphi 0, %s47
      %s64 = sphi 0, %s48
      %s68 = sphi 0, %s68
      %s70 = sphi 0, %s68
      %s71 = sphi 0, %s70
      %s85 = sphi 0, %s71
      %s93 = sphi 0, %s95
      %s96 = sphi 0, %s93
      %s97 = sphi 0, %s96
      %s113 = sphi 0, %s97
      %s121 = sphi 0, %s123
      %s124 = sphi 0, %s121
      %s125 = sphi 0, %s124
      %s141 = sphi 0, %s125
    $region4: #{tpu_custom_call.1} parent=1 // loop_header_branch
      %23 = sbr.rel (%p21) target = $region8
    $region5: #{tpu_custom_call.1} parent=1 // loop_body
      %s25 = ssub.s32 %s20, 1
      %s26 = ssub.s32 %s20, 2
      %s33 = sadd.s32 1, %s28
      %p34 = scmp.ge.s32.totalorder %s33, 1
      %s35 = scalar_select %p34, 0, %s33
      %s36 = sadd.s32 1, %s27
      %s37 = scalar_select %p34, %s36, %s27
      %p38 = scmp.ge.s32.totalorder %s37, 2
      %s39 = scalar_select %p38, 0, %s37
      %s40 = ssub.s32 %s27, %s39
      %s41 = ssub.s32 %s28, %s35
      %s42 = sor.u32 %s40, %s41
      %p43 = scmp.eq.s32.totalorder %s42, 0
      %s45 = sadd.s32 %s44, 1
      %s46 = scalar_select %p43, %s44, %s45
      %p49 = pneg %p43
      %p50 = scmp.eq.s32.totalorder %s20, 1
      %p51 = por %p49, %p50
      %p52 = scmp.ne.s32.totalorder %s44, %s47
      %p53 = scmp.eq.s32.totalorder %s20, 0
      %p54 = por %p52, %p53
      %p55 = scmp.ne.s32.totalorder %s44, %s47
      %p56 = scmp.eq.s32.totalorder %s25, 1
      %p57 = por %p55, %p56
      %p58 = scmp.ne.s32.totalorder %s47, %s48
      %p59 = scmp.eq.s32.totalorder %s25, 0
      %p60 = por %p58, %p59
      %p61 = scmp.ne.s32.totalorder %s47, %s48
      %p62 = scmp.eq.s32.totalorder %s26, 1
      %p63 = por %p61, %p62
      %p65 = scmp.ne.s32.totalorder %s48, %s64
      %p66 = scmp.eq.s32.totalorder %s26, 0
      %p67 = por %p65, %p66
      %s69 = sadd.s32 %s68, 1
      %p72 = scmp.eq.s32.totalorder %s20, 1
      %p73 = scmp.ne.s32.totalorder %s68, %s70
      %p74 = scmp.eq.s32.totalorder %s20, 0
      %p75 = por %p73, %p74
      %p76 = scmp.ne.s32.totalorder %s68, %s70
      %p77 = scmp.eq.s32.totalorder %s25, 1
      %p78 = por %p76, %p77
      %p79 = scmp.ne.s32.totalorder %s70, %s71
      %p80 = scmp.eq.s32.totalorder %s25, 0
      %p81 = por %p79, %p80
      %p82 = scmp.ne.s32.totalorder %s70, %s71
      %p83 = scmp.eq.s32.totalorder %s26, 1
      %p84 = por %p82, %p83
      %p86 = scmp.ne.s32.totalorder %s71, %s85
      %p87 = scmp.eq.s32.totalorder %s26, 0
      %p88 = por %p86, %p87
      %s89 = ssub.s32 %s27, %s39
      %s90 = ssub.s32 %s28, %s35
      %s91 = sor.u32 %s89, %s90
      %p92 = scmp.eq.s32.totalorder %s91, 0
      %s94 = sadd.s32 %s93, 1
      %s95 = scalar_select %p92, %s93, %s94
      %p98 = pneg %p92
      %p99 = scmp.eq.s32.totalorder %s20, 1
      %p100 = por %p98, %p99
      %p101 = scmp.ne.s32.totalorder %s93, %s96
      %p102 = scmp.eq.s32.totalorder %s20, 0
      %p103 = por %p101, %p102
      %p104 = scmp.ne.s32.totalorder %s93, %s96
      %p105 = scmp.eq.s32.totalorder %s25, 1
      %p106 = por %p104, %p105
      %p107 = scmp.ne.s32.totalorder %s96, %s97
      %p108 = scmp.eq.s32.totalorder %s25, 0
      %p109 = por %p107, %p108
      %p110 = scmp.ne.s32.totalorder %s96, %s97
      %p111 = scmp.eq.s32.totalorder %s26, 1
      %p112 = por %p110, %p111
      %p114 = scmp.ne.s32.totalorder %s97, %s113
      %p115 = scmp.eq.s32.totalorder %s26, 0
      %p116 = por %p114, %p115
      %s117 = ssub.s32 %s27, %s39
      %s118 = ssub.s32 %s28, %s35
      %s119 = sor.u32 %s117, %s118
      %p120 = scmp.eq.s32.totalorder %s119, 0
      %s122 = sadd.s32 %s121, 1
      %s123 = scalar_select %p120, %s121, %s122
      %p126 = pneg %p120
      %p127 = scmp.eq.s32.totalorder %s20, 1
      %p128 = por %p126, %p127
      %p129 = scmp.ne.s32.totalorder %s121, %s124
      %p130 = scmp.eq.s32.totalorder %s20, 0
      %p131 = por %p129, %p130
      %p132 = scmp.ne.s32.totalorder %s121, %s124
      %p133 = scmp.eq.s32.totalorder %s25, 1
      %p134 = por %p132, %p133
      %p135 = scmp.ne.s32.totalorder %s124, %s125
      %p136 = scmp.eq.s32.totalorder %s25, 0
      %p137 = por %p135, %p136
      %p138 = scmp.ne.s32.totalorder %s124, %s125
      %p139 = scmp.eq.s32.totalorder %s26, 1
      %p140 = por %p138, %p139
      %p142 = scmp.ne.s32.totalorder %s125, %s141
      %p143 = scmp.eq.s32.totalorder %s26, 0
      %p144 = por %p142, %p143
      %p145 = scmp.le.s32.totalorder 1, %s20
      %p146 = scmp.lt.s32.totalorder %s20, 3
      %p147 = pnand %p145, %p146
      %p148 = pneg %p147
      // Predicated region
      $region9: #{tpu_custom_call.1} parent=5 // pred_check
        _
      $region10: #{tpu_custom_call.1} parent=5 // pred_check_branch
        %150 = sbr.rel (%p147) target = $region12
      $region11: #{tpu_custom_call.1} parent=5 // pred_region
        %s151 = ssub.s32 %s20, 1
        // Predicated region
        $region13: #{tpu_custom_call.1} parent=11 // pred_check
          %p152 = pneg %p81
        $region14: #{tpu_custom_call.1} parent=11 // pred_check_branch
          %154 = sbr.rel (%p152) target = $region16
        $region15: #{tpu_custom_call.1} parent=11 // pred_region
          %s156 = ssub.s32 256, 256
          %157 = vsyncadd [#allocation6], %s156
          %s158 = sshll.u32 [#allocation5], 4
          %s159 = int_to_ptr.vmem [resolvable:$true] %s158
          %164 = dma.hbm_to_vmem [thread:$0]  %s1, 256, %s159, [#allocation6], 64, 64, 4
        $region16: #{tpu_custom_call.1} parent=11 // pred_fallthru
          _
      $region12: #{tpu_custom_call.1} parent=5 // pred_fallthru
        _
      %p165 = scmp.lt.s32.totalorder %s20, 2
      // Predicated region
      $region17: #{tpu_custom_call.1} parent=5 // pred_check
        %p166 = pneg %p165
      $region18: #{tpu_custom_call.1} parent=5 // pred_check_branch
        %168 = sbr.rel (%p166) target = $region20
      $region19: #{tpu_custom_call.1} parent=5 // pred_region
        // Predicated region
        $region21: #{tpu_custom_call.1} parent=19 // pred_check
          %p169 = pneg %p54
        $region22: #{tpu_custom_call.1} parent=19 // pred_check_branch
          %171 = sbr.rel (%p169) target = $region24
        $region23: #{tpu_custom_call.1} parent=19 // pred_region
          %s172 = sand.u32 %s44, 1
          %s173 = scalar_lea.sflag [#allocation3], %s172
          %s174 = sand.u32 %s44, 1
          %s175 = smul.addr %s174, 4
          %s176 = scalar_lea.vmem [#allocation2], %s175
          %s178 = ssub.s32 64, 64
          %179 = vsyncadd %s173, %s178
          %s180 = sadd.s32 %s28, %s27
          %s181 = smul.addr %s180, 64
          %s182 = scalar_lea.hbm %s0, %s181
          %s184 = sshll.u32 %s176, 4
          %s185 = int_to_ptr.vmem [resolvable:$true] %s184
          %187 = dma.hbm_to_vmem [thread:$0]  %s182, 64, %s185, %s173
        $region24: #{tpu_custom_call.1} parent=19 // pred_fallthru
          _
      $region20: #{tpu_custom_call.1} parent=5 // pred_fallthru
        _
      %p188 = scmp.le.s32.totalorder 1, %s20
      %p189 = scmp.lt.s32.totalorder %s20, 3
      %p190 = pnand %p188, %p189
      %p191 = pneg %p190
      // Predicated region
      $region25: #{tpu_custom_call.1} parent=5 // pred_check
        _
      $region26: #{tpu_custom_call.1} parent=5 // pred_check_branch
        %193 = sbr.rel (%p190) target = $region28
      $region27: #{tpu_custom_call.1} parent=5 // pred_region
        %s194 = ssub.s32 %s20, 1
        %s195 = sand.u32 %s47, 1
        %s196 = scalar_lea.sflag [#allocation3], %s195
        %s197 = sand.u32 %s47, 1
        %s198 = smul.addr %s197, 4
        %s199 = scalar_lea.vmem [#allocation2], %s198
        // Predicated region
        $region29: #{tpu_custom_call.1} parent=27 // pred_check
          %p200 = pneg %p60
        $region30: #{tpu_custom_call.1} parent=27 // pred_check_branch
          %202 = sbr.rel (%p200) target = $region32
        $region31: #{tpu_custom_call.1} parent=27 // pred_region
          %203 = dma.done %s196, 64
        $region32: #{tpu_custom_call.1} parent=27 // pred_fallthru
          _
        // Predicated region
        $region33: #{tpu_custom_call.1} parent=27 // pred_check
          %p204 = pneg %p81
        $region34: #{tpu_custom_call.1} parent=27 // pred_check_branch
          %206 = sbr.rel (%p204) target = $region36
        $region35: #{tpu_custom_call.1} parent=27 // pred_region
          %207 = dma.done [#allocation6], 256
        $region36: #{tpu_custom_call.1} parent=27 // pred_fallthru
          _
        %s208 = sand.u32 %s47, 1
        %s209 = scalar_lea.sflag [#allocation3], %s208
        %s210 = sand.u32 %s47, 1
        %s211 = smul.addr %s210, 4
        %s212 = scalar_lea.vmem [#allocation2], %s211
        %p213 = pneg %p60
        %p214 = pneg %p57
        %p215 = pneg %p81
        %p216 = pneg %p78
        %p217 = pneg %p109
        %p218 = pneg %p106
        %s219 = sand.u32 %s96, 1
        %s220 = scalar_lea.sflag [#allocation4], %s219
        %s221 = sand.u32 %s96, 1
        %s222 = smul.addr %s221, 16
        %s223 = scalar_lea.vmem [#allocation7], %s222
        %p224 = pneg %p137
        %p225 = pneg %p134
        %s226 = sand.u32 %s124, 1
        %s227 = scalar_lea.sflag [#allocation9], %s226
        %s228 = sand.u32 %s124, 1
        %s229 = smul.addr %s228, 32
        %s230 = scalar_lea.vmem [#allocation8], %s229
        %v232 = vld [vmem:[%s199] sm:$0xf]
        %v233 = vld [vmem:[#allocation5] sm:$0xf]
        %v234 = vld [vmem:[#allocation5 + $0x4] sm:$0xf]
        %v235 = vld [vmem:[#allocation5 + $0x8] sm:$0xf]
        %v236 = vld [vmem:[#allocation5 + $0xc] sm:$0xf]
        %v241 = vunpack.c.l.b16 %v233
        %v242 = vunpack.c.l.b16 %v234
        %v243 = vunpack.c.l.b16 %v235
        %v244 = vunpack.c.l.b16 %v236
        %v245 = vpack.c.b16 %v242, %v241
        %v246 = vpack.c.b16 %v244, %v243
        %vm249 = vcmask 261120
        %v251 = vsel %vm249, %v232, 0
        %253 = vmatprep.subr.bf16.mxu0 0
        %254 = vmatpush1.bf16.msra.mxu0 %v245
        %255 = vmatprep.subr.bf16.mxu0 0
        %256 = vmatpush1.bf16.msra.mxu0 %v246
        %257 = vmatprep.subr.bf16.mxu0 0
        %258 = vmatpush1.bf16.msra.mxu0 0
        %259 = vmatprep.subr.bf16.mxu0 0
        %260 = vmatpush1.bf16.msra.mxu0 0
        %261 = vmatprep.subr.bf16.mxu0 0
        %262 = vmatpush1.bf16.msra.mxu0 0
        %263 = vmatprep.subr.bf16.mxu0 0
        %264 = vmatpush1.bf16.msra.mxu0 0
        %265 = vmatprep.subr.bf16.mxu0 0
        %266 = vmatpush1.bf16.msra.mxu0 0
        %267 = vmatprep.subr.bf16.mxu0 0
        %268 = vmatpush1.bf16.msra.mxu0 0
        %269 = vmatprep.subr.bf16.mxu0 0
        %270 = vmatpush1.bf16.msra.mxu0 0
        %271 = vmatprep.subr.bf16.mxu0 0
        %272 = vmatpush1.bf16.msra.mxu0 0
        %273 = vmatprep.subr.bf16.mxu0 0
        %274 = vmatpush1.bf16.msra.mxu0 0
        %275 = vmatprep.subr.bf16.mxu0 0
        %276 = vmatpush1.bf16.msra.mxu0 0
        %277 = vmatprep.subr.bf16.mxu0 0
        %278 = vmatpush1.bf16.msra.mxu0 0
        %279 = vmatprep.subr.bf16.mxu0 0
        %280 = vmatpush1.bf16.msra.mxu0 0
        %281 = vmatprep.subr.bf16.mxu0 0
        %282 = vmatpush1.bf16.msra.mxu0 0
        %283 = vmatprep.subr.bf16.mxu0 0
        %284 = vmatpush1.bf16.msra.mxu0 0
        %285 = vmatprep.mubr.bf16.mxu0 0
        %286 = vmatmul.mubr.bf16.gmra.mrb[0].mxu0 %v251
        %v287 = vpop.f32.mrb[0].mxu0
        %v288 = vadd.f32 0.0, %v287
        %v289 = vpop.f32.mrb[0].mxu0
        %v290 = vpop.f32.mrb[0].mxu0
        %v291 = vpop.f32.mrb[0].mxu0
        %292 = vdwg.mxu0
        %293 = vxpose.xlu0.b32.start [1/16] %v288, 128
        %294 = vxpose.xlu0.b32.cont [2/16] 0.0, 128
        %295 = vxpose.xlu0.b32.cont [3/16] 0.0, 128
        %296 = vxpose.xlu0.b32.cont [4/16] 0.0, 128
        %297 = vxpose.xlu0.b32.cont [5/16] 0.0, 128
        %298 = vxpose.xlu0.b32.cont [6/16] 0.0, 128
        %299 = vxpose.xlu0.b32.cont [7/16] 0.0, 128
        %300 = vxpose.xlu0.b32.cont [8/16] 0.0, 128
        %301 = vxpose.xlu0.b32.cont [9/16] 0.0, 128
        %302 = vxpose.xlu0.b32.cont [10/16] 0.0, 128
        %303 = vxpose.xlu0.b32.cont [11/16] 0.0, 128
        %304 = vxpose.xlu0.b32.cont [12/16] 0.0, 128
        %305 = vxpose.xlu0.b32.cont [13/16] 0.0, 128
        %306 = vxpose.xlu0.b32.cont [14/16] 0.0, 128
        %307 = vxpose.xlu0.b32.cont [15/16] 0.0, 128
        %308 = vxpose.xlu0.b32.end [16/16] 0.0, 128
        %v309 = vpop.trf.xlu0
        %v310 = vpop.trf.xlu0
        %v311 = vpop.trf.xlu0
        %v312 = vpop.trf.xlu0
        %v313 = vpop.trf.xlu0
        %v314 = vpop.trf.xlu0
        %v315 = vpop.trf.xlu0
        %v316 = vpop.trf.xlu0
        %v317 = vpop.trf.xlu0
        %v318 = vpop.trf.xlu0
        %v319 = vpop.trf.xlu0
        %v320 = vpop.trf.xlu0
        %v321 = vpop.trf.xlu0
        %v322 = vpop.trf.xlu0
        %v323 = vpop.trf.xlu0
        %v324 = vpop.trf.xlu0
        %v325 = vpack.c.bf16 %v309, %v309
        %vm326 = vcmask 58368
        %327 = vst.msk [vmem:[%s223] sm:$0x3] %vm326, %v325
        %v328 = vpack.c.bf16 %v288, %v288
        %v330 = vunpack.c.l.b16 %v328
        %v331 = vpack.c.b16 %v330, %v330
        %332 = vrot.lane.b32.xlu0 %v331, 96
        %v333 = vpop.permute.xlu0 %332
        %vm335 = vcmask 27648
        %336 = vst.msk [vmem:[%s230] sm:$0xf] %vm335, %v333
        %338 = vrot.lane.b32.xlu0 %v288, 124
        %v339 = vpop.permute.xlu0 %338
        %341 = vxpose.xlu0.b32.start [1/16] %v339, 128
        %342 = vxpose.xlu0.b32.cont [2/16] 0.0, 128
        %343 = vxpose.xlu0.b32.cont [3/16] 0.0, 128
        %344 = vxpose.xlu0.b32.cont [4/16] 0.0, 128
        %345 = vxpose.xlu0.b32.cont [5/16] 0.0, 128
        %346 = vxpose.xlu0.b32.cont [6/16] 0.0, 128
        %347 = vxpose.xlu0.b32.cont [7/16] 0.0, 128
        %348 = vxpose.xlu0.b32.cont [8/16] 0.0, 128
        %349 = vxpose.xlu0.b32.cont [9/16] 0.0, 128
        %350 = vxpose.xlu0.b32.cont [10/16] 0.0, 128
        %351 = vxpose.xlu0.b32.cont [11/16] 0.0, 128
        %352 = vxpose.xlu0.b32.cont [12/16] 0.0, 128
        %353 = vxpose.xlu0.b32.cont [13/16] 0.0, 128
        %354 = vxpose.xlu0.b32.cont [14/16] 0.0, 128
        %355 = vxpose.xlu0.b32.cont [15/16] 0.0, 128
        %356 = vxpose.xlu0.b32.end [16/16] 0.0, 128
        %v357 = vpop.trf.xlu0
        %v358 = vpop.trf.xlu0
        %v359 = vpop.trf.xlu0
        %v360 = vpop.trf.xlu0
        %v361 = vpop.trf.xlu0
        %v362 = vpop.trf.xlu0
        %v363 = vpop.trf.xlu0
        %v364 = vpop.trf.xlu0
        %v365 = vpop.trf.xlu0
        %v366 = vpop.trf.xlu0
        %v367 = vpop.trf.xlu0
        %v368 = vpop.trf.xlu0
        %v369 = vpop.trf.xlu0
        %v370 = vpop.trf.xlu0
        %v371 = vpop.trf.xlu0
        %v372 = vpop.trf.xlu0
        %v373 = vpack.c.bf16 %v357, %v357
        %s374 = scalar_lea.vmem %s223, 2 [#allocation7]
        %375 = vst.msk [vmem:[%s374] sm:$0x3] %vm326, %v373
        %376 = vrot.lane.b32.xlu0 %v331, 92
        %v377 = vpop.permute.xlu0 %376
        %s379 = scalar_lea.vmem %s230, 4 [#allocation8]
        %380 = vst.msk [vmem:[%s379] sm:$0xf] %vm335, %v377
        %381 = vrot.lane.b32.xlu0 %v288, 120
        %v382 = vpop.permute.xlu0 %381
        %384 = vxpose.xlu0.b32.start [1/16] %v382, 128
        %385 = vxpose.xlu0.b32.cont [2/16] 0.0, 128
        %386 = vxpose.xlu0.b32.cont [3/16] 0.0, 128
        %387 = vxpose.xlu0.b32.cont [4/16] 0.0, 128
        %388 = vxpose.xlu0.b32.cont [5/16] 0.0, 128
        %389 = vxpose.xlu0.b32.cont [6/16] 0.0, 128
        %390 = vxpose.xlu0.b32.cont [7/16] 0.0, 128
        %391 = vxpose.xlu0.b32.cont [8/16] 0.0, 128
        %392 = vxpose.xlu0.b32.cont [9/16] 0.0, 128
        %393 = vxpose.xlu0.b32.cont [10/16] 0.0, 128
        %394 = vxpose.xlu0.b32.cont [11/16] 0.0, 128
        %395 = vxpose.xlu0.b32.cont [12/16] 0.0, 128
        %396 = vxpose.xlu0.b32.cont [13/16] 0.0, 128
        %397 = vxpose.xlu0.b32.cont [14/16] 0.0, 128
        %398 = vxpose.xlu0.b32.cont [15/16] 0.0, 128
        %399 = vxpose.xlu0.b32.end [16/16] 0.0, 128
        %v400 = vpop.trf.xlu0
        %v401 = vpop.trf.xlu0
        %v402 = vpop.trf.xlu0
        %v403 = vpop.trf.xlu0
        %v404 = vpop.trf.xlu0
        %v405 = vpop.trf.xlu0
        %v406 = vpop.trf.xlu0
        %v407 = vpop.trf.xlu0
        %v408 = vpop.trf.xlu0
        %v409 = vpop.trf.xlu0
        %v410 = vpop.trf.xlu0
        %v411 = vpop.trf.xlu0
        %v412 = vpop.trf.xlu0
        %v413 = vpop.trf.xlu0
        %v414 = vpop.trf.xlu0
        %v415 = vpop.trf.xlu0
        %v416 = vpack.c.bf16 %v400, %v400
        %s417 = scalar_lea.vmem %s223, 4 [#allocation7]
        %418 = vst.msk [vmem:[%s417] sm:$0x3] %vm326, %v416
        %419 = vrot.lane.b32.xlu0 %v331, 88
        %v420 = vpop.permute.xlu0 %419
        %s422 = scalar_lea.vmem %s230, 8 [#allocation8]
        %423 = vst.msk [vmem:[%s422] sm:$0xf] %vm335, %v420
        %424 = vrot.lane.b32.xlu0 %v288, 116
        %v425 = vpop.permute.xlu0 %424
        %427 = vxpose.xlu0.b32.start [1/16] %v425, 128
        %428 = vxpose.xlu0.b32.cont [2/16] 0.0, 128
        %429 = vxpose.xlu0.b32.cont [3/16] 0.0, 128
        %430 = vxpose.xlu0.b32.cont [4/16] 0.0, 128
        %431 = vxpose.xlu0.b32.cont [5/16] 0.0, 128
        %432 = vxpose.xlu0.b32.cont [6/16] 0.0, 128
        %433 = vxpose.xlu0.b32.cont [7/16] 0.0, 128
        %434 = vxpose.xlu0.b32.cont [8/16] 0.0, 128
        %435 = vxpose.xlu0.b32.cont [9/16] 0.0, 128
        %436 = vxpose.xlu0.b32.cont [10/16] 0.0, 128
        %437 = vxpose.xlu0.b32.cont [11/16] 0.0, 128
        %438 = vxpose.xlu0.b32.cont [12/16] 0.0, 128
        %439 = vxpose.xlu0.b32.cont [13/16] 0.0, 128
        %440 = vxpose.xlu0.b32.cont [14/16] 0.0, 128
        %441 = vxpose.xlu0.b32.cont [15/16] 0.0, 128
        %442 = vxpose.xlu0.b32.end [16/16] 0.0, 128
        %v443 = vpop.trf.xlu0
        %v444 = vpop.trf.xlu0
        %v445 = vpop.trf.xlu0
        %v446 = vpop.trf.xlu0
        %v447 = vpop.trf.xlu0
        %v448 = vpop.trf.xlu0
        %v449 = vpop.trf.xlu0
        %v450 = vpop.trf.xlu0
        %v451 = vpop.trf.xlu0
        %v452 = vpop.trf.xlu0
        %v453 = vpop.trf.xlu0
        %v454 = vpop.trf.xlu0
        %v455 = vpop.trf.xlu0
        %v456 = vpop.trf.xlu0
        %v457 = vpop.trf.xlu0
        %v458 = vpop.trf.xlu0
        %v459 = vpack.c.bf16 %v443, %v443
        %s460 = scalar_lea.vmem %s223, 6 [#allocation7]
        %461 = vst.msk [vmem:[%s460] sm:$0x3] %vm326, %v459
        %462 = vrot.lane.b32.xlu0 %v331, 84
        %v463 = vpop.permute.xlu0 %462
        %s465 = scalar_lea.vmem %s230, 12 [#allocation8]
        %466 = vst.msk [vmem:[%s465] sm:$0xf] %vm335, %v463
        %467 = vrot.lane.b32.xlu0 %v288, 112
        %v468 = vpop.permute.xlu0 %467
        %470 = vxpose.xlu0.b32.start [1/16] %v468, 128
        %471 = vxpose.xlu0.b32.cont [2/16] 0.0, 128
        %472 = vxpose.xlu0.b32.cont [3/16] 0.0, 128
        %473 = vxpose.xlu0.b32.cont [4/16] 0.0, 128
        %474 = vxpose.xlu0.b32.cont [5/16] 0.0, 128
        %475 = vxpose.xlu0.b32.cont [6/16] 0.0, 128
        %476 = vxpose.xlu0.b32.cont [7/16] 0.0, 128
        %477 = vxpose.xlu0.b32.cont [8/16] 0.0, 128
        %478 = vxpose.xlu0.b32.cont [9/16] 0.0, 128
        %479 = vxpose.xlu0.b32.cont [10/16] 0.0, 128
        %480 = vxpose.xlu0.b32.cont [11/16] 0.0, 128
        %481 = vxpose.xlu0.b32.cont [12/16] 0.0, 128
        %482 = vxpose.xlu0.b32.cont [13/16] 0.0, 128
        %483 = vxpose.xlu0.b32.cont [14/16] 0.0, 128
        %484 = vxpose.xlu0.b32.cont [15/16] 0.0, 128
        %485 = vxpose.xlu0.b32.end [16/16] 0.0, 128
        %v486 = vpop.trf.xlu0
        %v487 = vpop.trf.xlu0
        %v488 = vpop.trf.xlu0
        %v489 = vpop.trf.xlu0
        %v490 = vpop.trf.xlu0
        %v491 = vpop.trf.xlu0
        %v492 = vpop.trf.xlu0
        %v493 = vpop.trf.xlu0
        %v494 = vpop.trf.xlu0
        %v495 = vpop.trf.xlu0
        %v496 = vpop.trf.xlu0
        %v497 = vpop.trf.xlu0
        %v498 = vpop.trf.xlu0
        %v499 = vpop.trf.xlu0
        %v500 = vpop.trf.xlu0
        %v501 = vpop.trf.xlu0
        %v502 = vpack.c.bf16 %v486, %v486
        %s503 = scalar_lea.vmem %s223, 8 [#allocation7]
        %504 = vst.msk [vmem:[%s503] sm:$0x3] %vm326, %v502
        %505 = vrot.lane.b32.xlu0 %v331, 80
        %v506 = vpop.permute.xlu0 %505
        %s508 = scalar_lea.vmem %s230, 16 [#allocation8]
        %509 = vst.msk [vmem:[%s508] sm:$0xf] %vm335, %v506
        %510 = vrot.lane.b32.xlu0 %v288, 108
        %v511 = vpop.permute.xlu0 %510
        %513 = vxpose.xlu0.b32.start [1/16] %v511, 128
        %514 = vxpose.xlu0.b32.cont [2/16] 0.0, 128
        %515 = vxpose.xlu0.b32.cont [3/16] 0.0, 128
        %516 = vxpose.xlu0.b32.cont [4/16] 0.0, 128
        %517 = vxpose.xlu0.b32.cont [5/16] 0.0, 128
        %518 = vxpose.xlu0.b32.cont [6/16] 0.0, 128
        %519 = vxpose.xlu0.b32.cont [7/16] 0.0, 128
        %520 = vxpose.xlu0.b32.cont [8/16] 0.0, 128
        %521 = vxpose.xlu0.b32.cont [9/16] 0.0, 128
        %522 = vxpose.xlu0.b32.cont [10/16] 0.0, 128
        %523 = vxpose.xlu0.b32.cont [11/16] 0.0, 128
        %524 = vxpose.xlu0.b32.cont [12/16] 0.0, 128
        %525 = vxpose.xlu0.b32.cont [13/16] 0.0, 128
        %526 = vxpose.xlu0.b32.cont [14/16] 0.0, 128
        %527 = vxpose.xlu0.b32.cont [15/16] 0.0, 128
        %528 = vxpose.xlu0.b32.end [16/16] 0.0, 128
        %v529 = vpop.trf.xlu0
        %v530 = vpop.trf.xlu0
        %v531 = vpop.trf.xlu0
        %v532 = vpop.trf.xlu0
        %v533 = vpop.trf.xlu0
        %v534 = vpop.trf.xlu0
        %v535 = vpop.trf.xlu0
        %v536 = vpop.trf.xlu0
        %v537 = vpop.trf.xlu0
        %v538 = vpop.trf.xlu0
        %v539 = vpop.trf.xlu0
        %v540 = vpop.trf.xlu0
        %v541 = vpop.trf.xlu0
        %v542 = vpop.trf.xlu0
        %v543 = vpop.trf.xlu0
        %v544 = vpop.trf.xlu0
        %v545 = vpack.c.bf16 %v529, %v529
        %s546 = scalar_lea.vmem %s223, 10 [#allocation7]
        %547 = vst.msk [vmem:[%s546] sm:$0x3] %vm326, %v545
        %548 = vrot.lane.b32.xlu0 %v331, 76
        %v549 = vpop.permute.xlu0 %548
        %s551 = scalar_lea.vmem %s230, 20 [#allocation8]
        %552 = vst.msk [vmem:[%s551] sm:$0xf] %vm335, %v549
        %553 = vrot.lane.b32.xlu0 %v288, 104
        %v554 = vpop.permute.xlu0 %553
        %556 = vxpose.xlu0.b32.start [1/16] %v554, 128
        %557 = vxpose.xlu0.b32.cont [2/16] 0.0, 128
        %558 = vxpose.xlu0.b32.cont [3/16] 0.0, 128
        %559 = vxpose.xlu0.b32.cont [4/16] 0.0, 128
        %560 = vxpose.xlu0.b32.cont [5/16] 0.0, 128
        %561 = vxpose.xlu0.b32.cont [6/16] 0.0, 128
        %562 = vxpose.xlu0.b32.cont [7/16] 0.0, 128
        %563 = vxpose.xlu0.b32.cont [8/16] 0.0, 128
        %564 = vxpose.xlu0.b32.cont [9/16] 0.0, 128
        %565 = vxpose.xlu0.b32.cont [10/16] 0.0, 128
        %566 = vxpose.xlu0.b32.cont [11/16] 0.0, 128
        %567 = vxpose.xlu0.b32.cont [12/16] 0.0, 128
        %568 = vxpose.xlu0.b32.cont [13/16] 0.0, 128
        %569 = vxpose.xlu0.b32.cont [14/16] 0.0, 128
        %570 = vxpose.xlu0.b32.cont [15/16] 0.0, 128
        %571 = vxpose.xlu0.b32.end [16/16] 0.0, 128
        %v572 = vpop.trf.xlu0
        %v573 = vpop.trf.xlu0
        %v574 = vpop.trf.xlu0
        %v575 = vpop.trf.xlu0
        %v576 = vpop.trf.xlu0
        %v577 = vpop.trf.xlu0
        %v578 = vpop.trf.xlu0
        %v579 = vpop.trf.xlu0
        %v580 = vpop.trf.xlu0
        %v581 = vpop.trf.xlu0
        %v582 = vpop.trf.xlu0
        %v583 = vpop.trf.xlu0
        %v584 = vpop.trf.xlu0
        %v585 = vpop.trf.xlu0
        %v586 = vpop.trf.xlu0
        %v587 = vpop.trf.xlu0
        %v588 = vpack.c.bf16 %v572, %v572
        %s589 = scalar_lea.vmem %s223, 12 [#allocation7]
        %590 = vst.msk [vmem:[%s589] sm:$0x3] %vm326, %v588
        %591 = vrot.lane.b32.xlu0 %v331, 72
        %v592 = vpop.permute.xlu0 %591
        %s594 = scalar_lea.vmem %s230, 24 [#allocation8]
        %595 = vst.msk [vmem:[%s594] sm:$0xf] %vm335, %v592
        %596 = vrot.lane.b32.xlu0 %v288, 100
        %v597 = vpop.permute.xlu0 %596
        %599 = vxpose.xlu0.b32.start [1/16] %v597, 128
        %600 = vxpose.xlu0.b32.cont [2/16] 0.0, 128
        %601 = vxpose.xlu0.b32.cont [3/16] 0.0, 128
        %602 = vxpose.xlu0.b32.cont [4/16] 0.0, 128
        %603 = vxpose.xlu0.b32.cont [5/16] 0.0, 128
        %604 = vxpose.xlu0.b32.cont [6/16] 0.0, 128
        %605 = vxpose.xlu0.b32.cont [7/16] 0.0, 128
        %606 = vxpose.xlu0.b32.cont [8/16] 0.0, 128
        %607 = vxpose.xlu0.b32.cont [9/16] 0.0, 128
        %608 = vxpose.xlu0.b32.cont [10/16] 0.0, 128
        %609 = vxpose.xlu0.b32.cont [11/16] 0.0, 128
        %610 = vxpose.xlu0.b32.cont [12/16] 0.0, 128
        %611 = vxpose.xlu0.b32.cont [13/16] 0.0, 128
        %612 = vxpose.xlu0.b32.cont [14/16] 0.0, 128
        %613 = vxpose.xlu0.b32.cont [15/16] 0.0, 128
        %614 = vxpose.xlu0.b32.end [16/16] 0.0, 128
        %v615 = vpop.trf.xlu0
        %v616 = vpop.trf.xlu0
        %v617 = vpop.trf.xlu0
        %v618 = vpop.trf.xlu0
        %v619 = vpop.trf.xlu0
        %v620 = vpop.trf.xlu0
        %v621 = vpop.trf.xlu0
        %v622 = vpop.trf.xlu0
        %v623 = vpop.trf.xlu0
        %v624 = vpop.trf.xlu0
        %v625 = vpop.trf.xlu0
        %v626 = vpop.trf.xlu0
        %v627 = vpop.trf.xlu0
        %v628 = vpop.trf.xlu0
        %v629 = vpop.trf.xlu0
        %v630 = vpop.trf.xlu0
        %v631 = vpack.c.bf16 %v615, %v615
        %s632 = scalar_lea.vmem %s223, 14 [#allocation7]
        %633 = vst.msk [vmem:[%s632] sm:$0x3] %vm326, %v631
        %634 = vrot.lane.b32.xlu0 %v331, 68
        %v635 = vpop.permute.xlu0 %634
        %s637 = scalar_lea.vmem %s230, 28 [#allocation8]
        %638 = vst.msk [vmem:[%s637] sm:$0xf] %vm335, %v635
        %s639 = sand.u32 %s96, 1
        %s640 = scalar_lea.sflag [#allocation4], %s639
        %s641 = sand.u32 %s96, 1
        %s642 = smul.addr %s641, 16
        %s643 = scalar_lea.vmem [#allocation7], %s642
        %s644 = sand.u32 %s124, 1
        %s645 = scalar_lea.sflag [#allocation9], %s644
        %s646 = sand.u32 %s124, 1
        %s647 = smul.addr %s646, 32
        %s648 = scalar_lea.vmem [#allocation8], %s647
        // Predicated region
        $region37: #{tpu_custom_call.1} parent=27 // pred_check
          %p649 = pneg %p106
        $region38: #{tpu_custom_call.1} parent=27 // pred_check_branch
          %651 = sbr.rel (%p649) target = $region40
        $region39: #{tpu_custom_call.1} parent=27 // pred_region
          %s653 = ssub.s32 256, 256
          %654 = vsyncadd %s640, %s653
          %s655 = smul.addr %s29, 8
          %s656 = sadd.s32 %s30, %s655
          %s657 = smul.addr %s656, 32
          %s658 = scalar_lea.hbm %s2, %s657
          %s659 = sshll.u32 %s643, 4
          %s660 = int_to_ptr.vmem [resolvable:$true] %s659
          %665 = dma.vmem_to_hbm [thread:$0]  %s660, 256, %s658, %s640, 32, 32, 2
        $region40: #{tpu_custom_call.1} parent=27 // pred_fallthru
          _
        // Predicated region
        $region41: #{tpu_custom_call.1} parent=27 // pred_check
          %p666 = pneg %p134
        $region42: #{tpu_custom_call.1} parent=27 // pred_check_branch
          %668 = sbr.rel (%p666) target = $region44
        $region43: #{tpu_custom_call.1} parent=27 // pred_region
          %s670 = ssub.s32 512, 512
          %671 = vsyncadd %s645, %s670
          %s672 = smul.addr %s29, 8
          %s673 = sadd.s32 %s30, %s672
          %s674 = smul.addr %s673, 64
          %s675 = scalar_lea.hbm %s3, %s674
          %s676 = sshll.u32 %s648, 4
          %s677 = int_to_ptr.vmem [resolvable:$true] %s676
          %682 = dma.vmem_to_hbm [thread:$0]  %s677, 512, %s675, %s645, 64, 64, 4
        $region44: #{tpu_custom_call.1} parent=27 // pred_fallthru
          _
      $region28: #{tpu_custom_call.1} parent=5 // pred_fallthru
        _
      %p683 = scmp.le.s32.totalorder 2, %s20
      // Predicated region
      $region45: #{tpu_custom_call.1} parent=5 // pred_check
        %p684 = pneg %p683
      $region46: #{tpu_custom_call.1} parent=5 // pred_check_branch
        %686 = sbr.rel (%p684) target = $region48
      $region47: #{tpu_custom_call.1} parent=5 // pred_region
        %s687 = ssub.s32 %s20, 2
        // Predicated region
        $region49: #{tpu_custom_call.1} parent=47 // pred_check
          %p688 = pneg %p112
        $region50: #{tpu_custom_call.1} parent=47 // pred_check_branch
          %690 = sbr.rel (%p688) target = $region52
        $region51: #{tpu_custom_call.1} parent=47 // pred_region
          %s691 = sand.u32 %s97, 1
          %s692 = scalar_lea.sflag [#allocation4], %s691
          %s693 = sand.u32 %s97, 1
          %s694 = smul.addr %s693, 16
          %s695 = scalar_lea.vmem [#allocation7], %s694
          %696 = dma.done %s692, 256
        $region52: #{tpu_custom_call.1} parent=47 // pred_fallthru
          _
        // Predicated region
        $region53: #{tpu_custom_call.1} parent=47 // pred_check
          %p697 = pneg %p140
        $region54: #{tpu_custom_call.1} parent=47 // pred_check_branch
          %699 = sbr.rel (%p697) target = $region56
        $region55: #{tpu_custom_call.1} parent=47 // pred_region
          %s700 = sand.u32 %s125, 1
          %s701 = scalar_lea.sflag [#allocation9], %s700
          %s702 = sand.u32 %s125, 1
          %s703 = smul.addr %s702, 32
          %s704 = scalar_lea.vmem [#allocation8], %s703
          %705 = dma.done %s701, 512
        $region56: #{tpu_custom_call.1} parent=47 // pred_fallthru
          _
      $region48: #{tpu_custom_call.1} parent=5 // pred_fallthru
        _
    $region6: #{tpu_custom_call.1} parent=1 // loop_footer
      %s24 = sadd.s32 1, %s20
    $region7: #{tpu_custom_call.1} parent=1 // loop_footer_branch
      %19 = sbr.rel target = $region3
    $region8: #{tpu_custom_call.1} parent=1 // loop_exit
      _
    %706 = vsyncpa [#allocation3], 1
    %s707 = scalar_lea.sflag [#allocation3], 1
    %708 = vsyncpa %s707, 1
    %709 = vsyncpa [#allocation6], 1
    %710 = vsyncpa [#allocation4], 1
    %s711 = scalar_lea.sflag [#allocation4], 1
    %712 = vsyncpa %s711, 1
    %713 = vsyncpa [#allocation9], 1
    %s714 = scalar_lea.sflag [#allocation9], 1
    %715 = vsyncpa %s714, 1

</llo_original>
